<compile_context>
chip_gen: v7x
topology: tpu7x:2x2x1
jax: 0.10.0
libtpu: 0.0.40
codegen_flags: <defaults>
</compile_context>

<pallas_src>
import functools

import jax
import jax.numpy as jnp
from jax.experimental import pallas as pl
from jax.experimental.pallas import tpu as pltpu

EPS = 1e-12  # eps used by torch.nn.functional.normalize


def attention_kernel(x_ref, w_ref, out_ref, *, att_times, att_weight):
    """Single invocation handles ALL att_num heads (no grid)."""
    N, D = x_ref.shape
    att_num = w_ref.shape[0]

    x = x_ref[...].astype(jnp.float32)                        # (N, D)
    W = w_ref[...].astype(jnp.float32)                        # (H, D, D)

    # Per-head activations, batched on a leading dim: (H, N, D).
    acts = jnp.broadcast_to(x[None, :, :], (att_num, N, D))

    output = None
    for _ in range(att_times):                                # static unroll
        # temp = mean over rows, per head -> (H, 1, D)  (sublane reduce)
        temp = jnp.mean(acts, axis=1, keepdims=True)

        if att_weight:
            # Tiny (1,D)@(D,D) matmuls, statically unrolled over heads
            # (att_num is small; avoids batched-dot lowering corner cases).
            h_avg = jnp.stack(
                [jnp.tanh(jnp.dot(temp[h, :, :], W[h, :, :],
                                  preferred_element_type=jnp.float32))
                 for h in range(att_num)],
                axis=0)                                        # (H, 1, D)
        else:
            h_avg = temp

        # att_style == 'dot': (x @ eye(D)) @ h_avg.T == rowwise dot(x, h_avg).
        # Lane reduce is fine at D=32; push to the MXU for large D.
        middle = jnp.sum(acts * h_avg, axis=2, keepdims=True)  # (H, N, 1)

        # F.normalize(p=1, dim=1) on a width-1 `middle`: the L1 norm of each
        # row equals |value|, so normalize == divide by max(|v|, eps).
        # NOTE: this shortcut only holds because `middle` has exactly one
        # column (interaction_dim == 1 on the 'dot' path).
        norm = jnp.maximum(jnp.abs(middle), EPS)
        att = jax.nn.sigmoid(middle / norm)                    # (H, N, 1)

        # output_h = att_h.T @ x_h == sum_n att[n] * x[n]  -> (H, 1, D)
        output = jnp.sum(att * acts, axis=1, keepdims=True)
        # x_new = x * att (broadcast over columns), fed to next att_time
        acts = acts * att

    # Single lane-dense store: concat heads along the lane axis -> (1, H*D).
    out_row = jnp.concatenate(
        [output[h, :, :] for h in range(att_num)], axis=-1)    # (1, H*D)
    out_ref[...] = out_row.astype(out_ref.dtype)


def attention_forward(x, w_stack, *, att_times, att_weight):
    """x: (N, D) f32;  w_stack: (att_num, D, D) f32 -> (1, att_num*D)."""
    assert att_times >= 1
    att_num, D, _ = w_stack.shape
    assert x.shape[1] == D

    kernel = functools.partial(
        attention_kernel, att_times=att_times, att_weight=att_weight)

    # No grid: one kernel invocation, whole arrays resident in VMEM.
    return pl.pallas_call(
        kernel,
        out_shape=jax.ShapeDtypeStruct((1, att_num * D), x.dtype),
        in_specs=[
            pl.BlockSpec(memory_space=pltpu.MemorySpace.VMEM),
            pl.BlockSpec(memory_space=pltpu.MemorySpace.VMEM),
        ],
        out_specs=pl.BlockSpec(memory_space=pltpu.MemorySpace.VMEM),
    )(x, w_stack)


def attention_reference(x, w_stack, *, att_times, att_weight):
    """Pure-JAX reference mirroring the PyTorch forward (for verification)."""
    outs = []
    for i in range(w_stack.shape[0]):
        acts = x
        output = None
        for _ in range(att_times):
            temp = jnp.mean(acts, axis=0, keepdims=True)
            h_avg = jnp.tanh(temp @ w_stack[i]) if att_weight else temp
            middle = acts @ h_avg.T
            norm = jnp.maximum(
                jnp.sum(jnp.abs(middle), axis=1, keepdims=True), EPS)
            att = jax.nn.sigmoid(middle / norm)
            output = att.T @ acts
            acts = acts * att
        outs.append(output)
    return jnp.concatenate(outs, axis=1)


def glorot(key, shape):
    """xavier_normal_: std = gain * sqrt(2 / (fan_in + fan_out))."""
    fan_in, fan_out = shape[-2], shape[-1]
    std = (2.0 / (fan_in + fan_out)) ** 0.5
    return std * jax.random.normal(key, shape, dtype=jnp.float32)


if __name__ == "__main__":
    # Module config: Attention(input_dim=32, att_times=2, att_num=2,
    #                          att_style='dot', att_weight=True)
    # TODO(synk): att_style 'slm' / 'ntn_k' branches are not implemented
    # (only the 'dot' path of the configured instance).
    N, D = 8, 32
    ATT_TIMES, ATT_NUM = 2, 2

    key = jax.random.PRNGKey(0)
    kx, kw = jax.random.split(key)
    x = jax.random.normal(kx, (N, D), dtype=jnp.float32)
    # Stacked per-head weights W_0..W_{att_num-1}, glorot-initialized.
    w_stack = glorot(kw, (ATT_NUM, D, D))

    out = attention_forward(x, w_stack, att_times=ATT_TIMES, att_weight=True)
    out = jax.block_until_ready(out)

    ref = attention_reference(x, w_stack, att_times=ATT_TIMES, att_weight=True)
    assert out.shape == (1, ATT_NUM * D), out.shape
    assert jnp.allclose(out, ref, atol=1e-5, rtol=1e-5), (out, ref)

    print("KERNEL_OK")
</pallas_src>

<mosaic_0001>
module attributes {stable_mosaic.version = 11 : i64} {
  func.func @attention_kernel(%arg0: memref<8x32xf32, #tpu.memory_space<vmem>>, %arg1: memref<2x32x32xf32, #tpu.memory_space<vmem>>, %arg2: memref<1x64xf32, #tpu.memory_space<vmem>>) attributes {dimension_semantics = [], scalar_prefetch = 0 : i64, scratch_operands = 0 : i64, tpu.core_type = #tpu.core_type<tc>} {
    %c0 = arith.constant 0 : index
    %c0_0 = arith.constant 0 : index
    %0 = vector.load %arg0[%c0, %c0_0] : memref<8x32xf32, #tpu.memory_space<vmem>>, vector<8x32xf32>
    %c0_1 = arith.constant 0 : index
    %c0_2 = arith.constant 0 : index
    %c0_3 = arith.constant 0 : index
    %1 = vector.load %arg1[%c0_1, %c0_2, %c0_3] : memref<2x32x32xf32, #tpu.memory_space<vmem>>, vector<2x32x32xf32>
    %2 = vector.shape_cast %0 : vector<8x32xf32> to vector<1x8x32xf32>
    %3 = vector.shape_cast %2 : vector<1x8x32xf32> to vector<1x8x32xf32>
    %4 = vector.broadcast %3 : vector<1x8x32xf32> to vector<2x8x32xf32>
    %cst = arith.constant dense<0.000000e+00> : vector<2x32xf32>
    %5 = vector.multi_reduction <add>, %4, %cst [1] : vector<2x8x32xf32> to vector<2x32xf32>
    %6 = vector.shape_cast %5 : vector<2x32xf32> to vector<2x1x32xf32>
    %cst_4 = arith.constant 8.000000e+00 : f32
    %7 = vector.broadcast %cst_4 : f32 to vector<2x1x32xf32>
    %8 = arith.divf %6, %7 : vector<2x1x32xf32>
    %9 = vector.extract_strided_slice %8 {offsets = [0, 0, 0], sizes = [1, 1, 32], strides = [1, 1, 1]} : vector<2x1x32xf32> to vector<1x1x32xf32>
    %10 = vector.shape_cast %9 : vector<1x1x32xf32> to vector<1x32xf32>
    %11 = vector.extract_strided_slice %1 {offsets = [0, 0, 0], sizes = [1, 32, 32], strides = [1, 1, 1]} : vector<2x32x32xf32> to vector<1x32x32xf32>
    %12 = vector.shape_cast %11 : vector<1x32x32xf32> to vector<32x32xf32>
    %cst_5 = arith.constant dense<0.000000e+00> : vector<1x32xf32>
    %13 = tpu.matmul %10, %12, %cst_5 {dimension_numbers = #tpu.dot_dimension_numbers<[1], [0], [0], [1], [0, 0, 1, 1], [], []>} : vector<1x32xf32>, vector<32x32xf32>, vector<1x32xf32> -> vector<1x32xf32>
    %14 = math.tanh %13 : vector<1x32xf32>
    %15 = vector.extract_strided_slice %8 {offsets = [1, 0, 0], sizes = [1, 1, 32], strides = [1, 1, 1]} : vector<2x1x32xf32> to vector<1x1x32xf32>
    %16 = vector.shape_cast %15 : vector<1x1x32xf32> to vector<1x32xf32>
    %17 = vector.extract_strided_slice %1 {offsets = [1, 0, 0], sizes = [1, 32, 32], strides = [1, 1, 1]} : vector<2x32x32xf32> to vector<1x32x32xf32>
    %18 = vector.shape_cast %17 : vector<1x32x32xf32> to vector<32x32xf32>
    %cst_6 = arith.constant dense<0.000000e+00> : vector<1x32xf32>
    %19 = tpu.matmul %16, %18, %cst_6 {dimension_numbers = #tpu.dot_dimension_numbers<[1], [0], [0], [1], [0, 0, 1, 1], [], []>} : vector<1x32xf32>, vector<32x32xf32>, vector<1x32xf32> -> vector<1x32xf32>
    %20 = math.tanh %19 : vector<1x32xf32>
    %21 = vector.shape_cast %14 : vector<1x32xf32> to vector<1x1x32xf32>
    %22 = vector.shape_cast %20 : vector<1x32xf32> to vector<1x1x32xf32>
    %23 = tpu.concatenate %21, %22 in 0 : vector<1x1x32xf32>, vector<1x1x32xf32> -> vector<2x1x32xf32>
    %24 = vector.broadcast %23 : vector<2x1x32xf32> to vector<2x8x32xf32>
    %25 = arith.mulf %4, %24 : vector<2x8x32xf32>
    %cst_7 = arith.constant dense<0.000000e+00> : vector<2x8xf32>
    %26 = vector.multi_reduction <add>, %25, %cst_7 [2] : vector<2x8x32xf32> to vector<2x8xf32>
    %27 = vector.shape_cast %26 : vector<2x8xf32> to vector<2x8x1xf32>
    %28 = math.absf %27 : vector<2x8x1xf32>
    %cst_8 = arith.constant 9.99999996E-13 : f32
    %29 = vector.broadcast %cst_8 : f32 to vector<2x8x1xf32>
    %30 = arith.maximumf %28, %29 : vector<2x8x1xf32>
    %31 = arith.divf %27, %30 : vector<2x8x1xf32>
    %32 = arith.negf %31 : vector<2x8x1xf32>
    %33 = math.exp %32 : vector<2x8x1xf32>
    %cst_9 = arith.constant 1.000000e+00 : f32
    %34 = vector.broadcast %cst_9 : f32 to vector<2x8x1xf32>
    %35 = arith.addf %34, %33 : vector<2x8x1xf32>
    %36 = arith.divf %34, %35 : vector<2x8x1xf32>
    %37 = vector.broadcast %36 : vector<2x8x1xf32> to vector<2x8x32xf32>
    %38 = arith.mulf %4, %37 : vector<2x8x32xf32>
    %cst_10 = arith.constant dense<0.000000e+00> : vector<2x32xf32>
    %39 = vector.multi_reduction <add>, %38, %cst_10 [1] : vector<2x8x32xf32> to vector<2x32xf32>
    %40 = vector.shape_cast %39 : vector<2x32xf32> to vector<2x1x32xf32>
    %cst_11 = arith.constant 8.000000e+00 : f32
    %41 = vector.broadcast %cst_11 : f32 to vector<2x1x32xf32>
    %42 = arith.divf %40, %41 : vector<2x1x32xf32>
    %43 = vector.extract_strided_slice %42 {offsets = [0, 0, 0], sizes = [1, 1, 32], strides = [1, 1, 1]} : vector<2x1x32xf32> to vector<1x1x32xf32>
    %44 = vector.shape_cast %43 : vector<1x1x32xf32> to vector<1x32xf32>
    %45 = vector.extract_strided_slice %1 {offsets = [0, 0, 0], sizes = [1, 32, 32], strides = [1, 1, 1]} : vector<2x32x32xf32> to vector<1x32x32xf32>
    %46 = vector.shape_cast %45 : vector<1x32x32xf32> to vector<32x32xf32>
    %cst_12 = arith.constant dense<0.000000e+00> : vector<1x32xf32>
    %47 = tpu.matmul %44, %46, %cst_12 {dimension_numbers = #tpu.dot_dimension_numbers<[1], [0], [0], [1], [0, 0, 1, 1], [], []>} : vector<1x32xf32>, vector<32x32xf32>, vector<1x32xf32> -> vector<1x32xf32>
    %48 = math.tanh %47 : vector<1x32xf32>
    %49 = vector.extract_strided_slice %42 {offsets = [1, 0, 0], sizes = [1, 1, 32], strides = [1, 1, 1]} : vector<2x1x32xf32> to vector<1x1x32xf32>
    %50 = vector.shape_cast %49 : vector<1x1x32xf32> to vector<1x32xf32>
    %51 = vector.extract_strided_slice %1 {offsets = [1, 0, 0], sizes = [1, 32, 32], strides = [1, 1, 1]} : vector<2x32x32xf32> to vector<1x32x32xf32>
    %52 = vector.shape_cast %51 : vector<1x32x32xf32> to vector<32x32xf32>
    %cst_13 = arith.constant dense<0.000000e+00> : vector<1x32xf32>
    %53 = tpu.matmul %50, %52, %cst_13 {dimension_numbers = #tpu.dot_dimension_numbers<[1], [0], [0], [1], [0, 0, 1, 1], [], []>} : vector<1x32xf32>, vector<32x32xf32>, vector<1x32xf32> -> vector<1x32xf32>
    %54 = math.tanh %53 : vector<1x32xf32>
    %55 = vector.shape_cast %48 : vector<1x32xf32> to vector<1x1x32xf32>
    %56 = vector.shape_cast %54 : vector<1x32xf32> to vector<1x1x32xf32>
    %57 = tpu.concatenate %55, %56 in 0 : vector<1x1x32xf32>, vector<1x1x32xf32> -> vector<2x1x32xf32>
    %58 = vector.broadcast %57 : vector<2x1x32xf32> to vector<2x8x32xf32>
    %59 = arith.mulf %38, %58 : vector<2x8x32xf32>
    %cst_14 = arith.constant dense<0.000000e+00> : vector<2x8xf32>
    %60 = vector.multi_reduction <add>, %59, %cst_14 [2] : vector<2x8x32xf32> to vector<2x8xf32>
    %61 = vector.shape_cast %60 : vector<2x8xf32> to vector<2x8x1xf32>
    %62 = math.absf %61 : vector<2x8x1xf32>
    %cst_15 = arith.constant 9.99999996E-13 : f32
    %63 = vector.broadcast %cst_15 : f32 to vector<2x8x1xf32>
    %64 = arith.maximumf %62, %63 : vector<2x8x1xf32>
    %65 = arith.divf %61, %64 : vector<2x8x1xf32>
    %66 = arith.negf %65 : vector<2x8x1xf32>
    %67 = math.exp %66 : vector<2x8x1xf32>
    %cst_16 = arith.constant 1.000000e+00 : f32
    %68 = vector.broadcast %cst_16 : f32 to vector<2x8x1xf32>
    %69 = arith.addf %68, %67 : vector<2x8x1xf32>
    %70 = arith.divf %68, %69 : vector<2x8x1xf32>
    %71 = vector.broadcast %70 : vector<2x8x1xf32> to vector<2x8x32xf32>
    %72 = arith.mulf %71, %38 : vector<2x8x32xf32>
    %cst_17 = arith.constant dense<0.000000e+00> : vector<2x32xf32>
    %73 = vector.multi_reduction <add>, %72, %cst_17 [1] : vector<2x8x32xf32> to vector<2x32xf32>
    %74 = vector.shape_cast %73 : vector<2x32xf32> to vector<2x1x32xf32>
    %75 = vector.extract_strided_slice %74 {offsets = [0, 0, 0], sizes = [1, 1, 32], strides = [1, 1, 1]} : vector<2x1x32xf32> to vector<1x1x32xf32>
    %76 = vector.shape_cast %75 : vector<1x1x32xf32> to vector<1x32xf32>
    %77 = vector.extract_strided_slice %74 {offsets = [1, 0, 0], sizes = [1, 1, 32], strides = [1, 1, 1]} : vector<2x1x32xf32> to vector<1x1x32xf32>
    %78 = vector.shape_cast %77 : vector<1x1x32xf32> to vector<1x32xf32>
    %79 = tpu.concatenate %76, %78 in 1 : vector<1x32xf32>, vector<1x32xf32> -> vector<1x64xf32>
    %c0_18 = arith.constant 0 : index
    %c0_19 = arith.constant 0 : index
    %80 = vector.load %arg2[%c0_18, %c0_19] : memref<1x64xf32, #tpu.memory_space<vmem>>, vector<1x64xf32>
    tpu.vector_store %arg2[%c0_18, %c0_19], %79 {strides = array<i32>} : memref<1x64xf32, #tpu.memory_space<vmem>>, vector<1x64xf32>,
    return
  }
}

</mosaic_0001>

<llo_original>
// kernel: tpu_custom_call.1
$region0: #{tpu_custom_call.1}
  #allocation0 [shape = 'u32[]', space=smem, size = 0x4, offset = 0x4, fixed_abs, tag = 'smem constant byte address 0x4 - core index']
  #allocation1 [shape = 'u32[144,128]{1,0:T(1,128)}', space=vmem, size = 0x12000, scoped, tag = 'internal scratch']
  %s0 = inlined_call_operand.hbm [shape: f32[8,32], index: 0, kind: input, shape index: {}]
  %s1 = inlined_call_operand.hbm [shape: f32[2,32,32], index: 1, kind: input, shape index: {}]
  %s2 = inlined_call_operand.hbm [shape: f32[1,64], index: 2, kind: output, shape index: {}]
  %s3 = sld [smem:[#allocation0]]
  $region26: #{tpu_custom_call.1} parent=0
    _
  %s5 = ssub.s32 1, %s3
  %s6 = scalar_select 0, %s5, %s3
  $region1: #{tpu_custom_call.1} parent=0
    #allocation2 [shape = 'u8[4096]{0}', space=vmem, size = 0x1000, scoped, tag = 'input window, operand 0, single buffered']
    #allocation3 [shape = 's32[1]{0}', space=sflag, size = 0x4, scoped, tag = 'scoped memory for tpu_custom_call.1']
    #allocation4 [shape = 's32[1]{0}', space=sflag, size = 0x4, scoped, tag = 'scoped memory for tpu_custom_call.1']
    #allocation5 [shape = 'u8[32768]{0}', space=vmem, size = 0x8000, scoped, tag = 'input window, operand 1, single buffered']
    #allocation6 [shape = 's32[1]{0}', space=sflag, size = 0x4, scoped, tag = 'scoped memory for tpu_custom_call.1']
    #allocation7 [shape = 'u8[512]{0}', space=vmem, size = 0x400, scoped, tag = 'output window, operand 0, single buffered']
    %7 = vsyncpa [#allocation3], 0
    %8 = vsyncpa [#allocation6], 0
    %9 = vsyncpa [#allocation4], 0
    // Predicated region
    $region2: #{tpu_custom_call.1} parent=1 // pred_check
      _
    $region3: #{tpu_custom_call.1} parent=1 // pred_check_branch
      %11 = sbr.rel (0) target = $region5
    $region4: #{tpu_custom_call.1} parent=1 // pred_region
      %s13 = ssub.s32 128, 128
      %14 = vsyncadd [#allocation3], %s13
      %s16 = sshll.u32 [#allocation2], 4
      %s17 = int_to_ptr.vmem [resolvable:$true] %s16
      %19 = dma.hbm_to_vmem [thread:$0]  %s0, 128, %s17, [#allocation3]
    $region5: #{tpu_custom_call.1} parent=1 // pred_fallthru
      _
    // Predicated region
    $region6: #{tpu_custom_call.1} parent=1 // pred_check
      _
    $region7: #{tpu_custom_call.1} parent=1 // pred_check_branch
      %21 = sbr.rel (0) target = $region9
    $region8: #{tpu_custom_call.1} parent=1 // pred_region
      %s23 = ssub.s32 1024, 1024
      %24 = vsyncadd [#allocation6], %s23
      %s25 = sshll.u32 [#allocation5], 4
      %s26 = int_to_ptr.vmem [resolvable:$true] %s25
      %31 = dma.hbm_to_vmem [thread:$0]  %s1, 1024, %s26, [#allocation6], 128, 128, 8
    $region9: #{tpu_custom_call.1} parent=1 // pred_fallthru
      _
    // Predicated region
    $region10: #{tpu_custom_call.1} parent=1 // pred_check
      _
    $region11: #{tpu_custom_call.1} parent=1 // pred_check_branch
      %33 = sbr.rel (0) target = $region13
    $region12: #{tpu_custom_call.1} parent=1 // pred_region
      %34 = dma.done [#allocation3], 128
    $region13: #{tpu_custom_call.1} parent=1 // pred_fallthru
      _
    // Predicated region
    $region14: #{tpu_custom_call.1} parent=1 // pred_check
      _
    $region15: #{tpu_custom_call.1} parent=1 // pred_check_branch
      %36 = sbr.rel (0) target = $region17
    $region16: #{tpu_custom_call.1} parent=1 // pred_region
      %37 = dma.done [#allocation6], 1024
    $region17: #{tpu_custom_call.1} parent=1 // pred_fallthru
      _
    %v38 = vld [vmem:[#allocation2] sm:$0xff]
    %v39 = vld [vmem:[#allocation5] sm:$0xff]
    %v40 = vld [vmem:[#allocation5 + $0x8] sm:$0xff]
    %v41 = vld [vmem:[#allocation5 + $0x10] sm:$0xff]
    %v42 = vld [vmem:[#allocation5 + $0x18] sm:$0xff]
    %v43 = vld [vmem:[#allocation5 + $0x20] sm:$0xff]
    %v44 = vld [vmem:[#allocation5 + $0x28] sm:$0xff]
    %v45 = vld [vmem:[#allocation5 + $0x30] sm:$0xff]
    %v46 = vld [vmem:[#allocation5 + $0x38] sm:$0xff]
    %vm47 = vcmask 261120
    %v48 = vsel %vm47, %v38, 0.0
    %v49 = vrot.slane %v48, 4
    %v50 = vadd.f32 %v48, %v49
    %v51 = vrot.slane %v50, 2
    %v52 = vadd.f32 %v50, %v51
    %v53 = vrot.slane %v52, 1
    %v54 = vadd.f32 %v52, %v53
    %v55 = vrcp.pop 8.0
    %v56 = vmul.f32 %v54, %v55
    %v58 = vsel %vm47, %v56, 0
    %60 = vmatprep.subr.mxu0 0.0
    %61 = vmatpush1.msra.mxu0 %v39
    %62 = vmatprep.subr.mxu0 0.0
    %63 = vmatpush1.msra.mxu0 %v40
    %64 = vmatprep.subr.mxu0 0.0
    %65 = vmatpush1.msra.mxu0 %v41
    %66 = vmatprep.subr.mxu0 0.0
    %67 = vmatpush1.msra.mxu0 %v42
    %68 = vmatprep.subr.mxu0 0.0
    %69 = vmatpush1.msra.mxu0 0.0
    %70 = vmatprep.subr.mxu0 0.0
    %71 = vmatpush1.msra.mxu0 0.0
    %72 = vmatprep.subr.mxu0 0.0
    %73 = vmatpush1.msra.mxu0 0.0
    %74 = vmatprep.subr.mxu0 0.0
    %75 = vmatpush1.msra.mxu0 0.0
    %76 = vmatprep.subr.mxu0 0.0
    %77 = vmatpush1.msra.mxu0 0.0
    %78 = vmatprep.subr.mxu0 0.0
    %79 = vmatpush1.msra.mxu0 0.0
    %80 = vmatprep.subr.mxu0 0.0
    %81 = vmatpush1.msra.mxu0 0.0
    %82 = vmatprep.subr.mxu0 0.0
    %83 = vmatpush1.msra.mxu0 0.0
    %84 = vmatprep.subr.mxu0 0.0
    %85 = vmatpush1.msra.mxu0 0.0
    %86 = vmatprep.subr.mxu0 0.0
    %87 = vmatpush1.msra.mxu0 0.0
    %88 = vmatprep.subr.mxu0 0.0
    %89 = vmatpush1.msra.mxu0 0.0
    %90 = vmatprep.subr.mxu0 0.0
    %91 = vmatpush1.msra.mxu0 0.0
    %92 = vmatprep.subr.mxu0 0.0
    %93 = vmatpush1.msra.mxu0 0.0
    %94 = vmatprep.subr.mxu0 0.0
    %95 = vmatpush1.msra.mxu0 0.0
    %96 = vmatprep.subr.mxu0 0.0
    %97 = vmatpush1.msra.mxu0 0.0
    %98 = vmatprep.subr.mxu0 0.0
    %99 = vmatpush1.msra.mxu0 0.0
    %100 = vmatprep.subr.mxu0 0.0
    %101 = vmatpush1.msra.mxu0 0.0
    %102 = vmatprep.subr.mxu0 0.0
    %103 = vmatpush1.msra.mxu0 0.0
    %104 = vmatprep.subr.mxu0 0.0
    %105 = vmatpush1.msra.mxu0 0.0
    %106 = vmatprep.subr.mxu0 0.0
    %107 = vmatpush1.msra.mxu0 0.0
    %108 = vmatprep.subr.mxu0 0.0
    %109 = vmatpush1.msra.mxu0 0.0
    %110 = vmatprep.subr.mxu0 0.0
    %111 = vmatpush1.msra.mxu0 0.0
    %112 = vmatprep.subr.mxu0 0.0
    %113 = vmatpush1.msra.mxu0 0.0
    %114 = vmatprep.subr.mxu0 0.0
    %115 = vmatpush1.msra.mxu0 0.0
    %116 = vmatprep.subr.mxu0 0.0
    %117 = vmatpush1.msra.mxu0 0.0
    %118 = vmatprep.subr.mxu0 0.0
    %119 = vmatpush1.msra.mxu0 0.0
    %120 = vmatprep.subr.mxu0 0.0
    %121 = vmatpush1.msra.mxu0 0.0
    %122 = vmatprep.subr.mxu0 0.0
    %123 = vmatpush1.msra.mxu0 0.0
    %124 = vmatprep.mubr.f32.mxu0 0.0
    %125 = vmatmul.mubr.f32.gmra.mrb[0].mxu0 %v58
    %v126 = vpop.f32.mrb[0].mxu0
    %v127 = vadd.f32 0.0, %v126
    %v128 = vpop.f32.mrb[0].mxu0
    %129 = vdwg.mxu0
    %v130 = vtanh.pop %v127
    %131 = vmatprep.subr.mxu0 0.0
    %132 = vmatpush1.msra.mxu0 %v43
    %133 = vmatprep.subr.mxu0 0.0
    %134 = vmatpush1.msra.mxu0 %v44
    %135 = vmatprep.subr.mxu0 0.0
    %136 = vmatpush1.msra.mxu0 %v45
    %137 = vmatprep.subr.mxu0 0.0
    %138 = vmatpush1.msra.mxu0 %v46
    %139 = vmatprep.subr.mxu0 0.0
    %140 = vmatpush1.msra.mxu0 0.0
    %141 = vmatprep.subr.mxu0 0.0
    %142 = vmatpush1.msra.mxu0 0.0
    %143 = vmatprep.subr.mxu0 0.0
    %144 = vmatpush1.msra.mxu0 0.0
    %145 = vmatprep.subr.mxu0 0.0
    %146 = vmatpush1.msra.mxu0 0.0
    %147 = vmatprep.subr.mxu0 0.0
    %148 = vmatpush1.msra.mxu0 0.0
    %149 = vmatprep.subr.mxu0 0.0
    %150 = vmatpush1.msra.mxu0 0.0
    %151 = vmatprep.subr.mxu0 0.0
    %152 = vmatpush1.msra.mxu0 0.0
    %153 = vmatprep.subr.mxu0 0.0
    %154 = vmatpush1.msra.mxu0 0.0
    %155 = vmatprep.subr.mxu0 0.0
    %156 = vmatpush1.msra.mxu0 0.0
    %157 = vmatprep.subr.mxu0 0.0
    %158 = vmatpush1.msra.mxu0 0.0
    %159 = vmatprep.subr.mxu0 0.0
    %160 = vmatpush1.msra.mxu0 0.0
    %161 = vmatprep.subr.mxu0 0.0
    %162 = vmatpush1.msra.mxu0 0.0
    %163 = vmatprep.subr.mxu0 0.0
    %164 = vmatpush1.msra.mxu0 0.0
    %165 = vmatprep.subr.mxu0 0.0
    %166 = vmatpush1.msra.mxu0 0.0
    %167 = vmatprep.subr.mxu0 0.0
    %168 = vmatpush1.msra.mxu0 0.0
    %169 = vmatprep.subr.mxu0 0.0
    %170 = vmatpush1.msra.mxu0 0.0
    %171 = vmatprep.subr.mxu0 0.0
    %172 = vmatpush1.msra.mxu0 0.0
    %173 = vmatprep.subr.mxu0 0.0
    %174 = vmatpush1.msra.mxu0 0.0
    %175 = vmatprep.subr.mxu0 0.0
    %176 = vmatpush1.msra.mxu0 0.0
    %177 = vmatprep.subr.mxu0 0.0
    %178 = vmatpush1.msra.mxu0 0.0
    %179 = vmatprep.subr.mxu0 0.0
    %180 = vmatpush1.msra.mxu0 0.0
    %181 = vmatprep.subr.mxu0 0.0
    %182 = vmatpush1.msra.mxu0 0.0
    %183 = vmatprep.subr.mxu0 0.0
    %184 = vmatpush1.msra.mxu0 0.0
    %185 = vmatprep.subr.mxu0 0.0
    %186 = vmatpush1.msra.mxu0 0.0
    %187 = vmatprep.subr.mxu0 0.0
    %188 = vmatpush1.msra.mxu0 0.0
    %189 = vmatprep.subr.mxu0 0.0
    %190 = vmatpush1.msra.mxu0 0.0
    %191 = vmatprep.subr.mxu0 0.0
    %192 = vmatpush1.msra.mxu0 0.0
    %193 = vmatprep.subr.mxu0 0.0
    %194 = vmatpush1.msra.mxu0 0.0
    %195 = vmatprep.mubr.f32.mxu0 0.0
    %196 = vmatmul.mubr.f32.gmra.mrb[0].mxu0 %v58
    %v197 = vpop.f32.mrb[0].mxu0
    %v198 = vadd.f32 0.0, %v197
    %v199 = vpop.f32.mrb[0].mxu0
    %200 = vdwg.mxu0
    %v201 = vtanh.pop %v198
    %v202 = vlaneseq
    %v203 = vshrl.u32 %v202, 7
    %v204 = vsub.s32 0, %v203
    %v205 = vrot.slane %v130, %v204
    %v206 = vlaneseq
    %v207 = vshrl.u32 %v206, 7
    %v208 = vsub.s32 0, %v207
    %v209 = vrot.slane %v201, %v208
    %v210 = vmul.f32 %v38, %v205
    %v211 = vmul.f32 %v38, %v209
    %v212 = vsel %vm47, %v210, 0.0
    %213 = vadd.xlane.f32.xlu0 %v212
    %v214 = vpop.xlane.xlu0 %213
    %v215 = vsel %vm47, %v211, 0.0
    %216 = vadd.xlane.f32.xlu0 %v215
    %v217 = vpop.xlane.xlu0 %216
    %v218 = vand.u32 2147483647, %v214
    %v219 = vand.u32 2147483647, %v217
    %v220 = vmax.f32 %v218, 1e-12
    %v221 = vmax.f32 %v219, 1e-12
    %v222 = vrcp.pop %v220
    %v223 = vmul.f32 %v214, %v222
    %v224 = vrcp.pop %v221
    %v225 = vmul.f32 %v217, %v224
    %v226 = vxor.u32 %v223, 2147483648
    %v227 = vxor.u32 %v225, 2147483648
    %v228 = vmul.f32 %v226, 1.442695
    %v229 = vpow.pop %v228
    %v230 = vmul.f32 %v227, 1.442695
    %v231 = vpow.pop %v230
    %v232 = vadd.f32 %v229, 1.0
    %v233 = vadd.f32 %v231, 1.0
    %v234 = vrcp.pop %v232
    %v235 = vmul.f32 1.0, %v234
    %v236 = vrcp.pop %v233
    %v237 = vmul.f32 1.0, %v236
    %v238 = vmul.f32 %v38, %v235
    %v239 = vmul.f32 %v38, %v237
    %v240 = vsel %vm47, %v238, 0.0
    %v241 = vrot.slane %v240, 4
    %v242 = vadd.f32 %v240, %v241
    %v243 = vrot.slane %v242, 2
    %v244 = vadd.f32 %v242, %v243
    %v245 = vrot.slane %v244, 1
    %v246 = vadd.f32 %v244, %v245
    %v247 = vsel %vm47, %v239, 0.0
    %v248 = vrot.slane %v247, 4
    %v249 = vadd.f32 %v247, %v248
    %v250 = vrot.slane %v249, 2
    %v251 = vadd.f32 %v249, %v250
    %v252 = vrot.slane %v251, 1
    %v253 = vadd.f32 %v251, %v252
    %v254 = vmul.f32 %v246, %v55
    %v255 = vmul.f32 %v253, %v55
    %v257 = vsel %vm47, %v254, 0
    %259 = vmatprep.subr.mxu0 0.0
    %260 = vmatpush1.msra.mxu0 %v39
    %261 = vmatprep.subr.mxu0 0.0
    %262 = vmatpush1.msra.mxu0 %v40
    %263 = vmatprep.subr.mxu0 0.0
    %264 = vmatpush1.msra.mxu0 %v41
    %265 = vmatprep.subr.mxu0 0.0
    %266 = vmatpush1.msra.mxu0 %v42
    %267 = vmatprep.subr.mxu0 0.0
    %268 = vmatpush1.msra.mxu0 0.0
    %269 = vmatprep.subr.mxu0 0.0
    %270 = vmatpush1.msra.mxu0 0.0
    %271 = vmatprep.subr.mxu0 0.0
    %272 = vmatpush1.msra.mxu0 0.0
    %273 = vmatprep.subr.mxu0 0.0
    %274 = vmatpush1.msra.mxu0 0.0
    %275 = vmatprep.subr.mxu0 0.0
    %276 = vmatpush1.msra.mxu0 0.0
    %277 = vmatprep.subr.mxu0 0.0
    %278 = vmatpush1.msra.mxu0 0.0
    %279 = vmatprep.subr.mxu0 0.0
    %280 = vmatpush1.msra.mxu0 0.0
    %281 = vmatprep.subr.mxu0 0.0
    %282 = vmatpush1.msra.mxu0 0.0
    %283 = vmatprep.subr.mxu0 0.0
    %284 = vmatpush1.msra.mxu0 0.0
    %285 = vmatprep.subr.mxu0 0.0
    %286 = vmatpush1.msra.mxu0 0.0
    %287 = vmatprep.subr.mxu0 0.0
    %288 = vmatpush1.msra.mxu0 0.0
    %289 = vmatprep.subr.mxu0 0.0
    %290 = vmatpush1.msra.mxu0 0.0
    %291 = vmatprep.subr.mxu0 0.0
    %292 = vmatpush1.msra.mxu0 0.0
    %293 = vmatprep.subr.mxu0 0.0
    %294 = vmatpush1.msra.mxu0 0.0
    %295 = vmatprep.subr.mxu0 0.0
    %296 = vmatpush1.msra.mxu0 0.0
    %297 = vmatprep.subr.mxu0 0.0
    %298 = vmatpush1.msra.mxu0 0.0
    %299 = vmatprep.subr.mxu0 0.0
    %300 = vmatpush1.msra.mxu0 0.0
    %301 = vmatprep.subr.mxu0 0.0
    %302 = vmatpush1.msra.mxu0 0.0
    %303 = vmatprep.subr.mxu0 0.0
    %304 = vmatpush1.msra.mxu0 0.0
    %305 = vmatprep.subr.mxu0 0.0
    %306 = vmatpush1.msra.mxu0 0.0
    %307 = vmatprep.subr.mxu0 0.0
    %308 = vmatpush1.msra.mxu0 0.0
    %309 = vmatprep.subr.mxu0 0.0
    %310 = vmatpush1.msra.mxu0 0.0
    %311 = vmatprep.subr.mxu0 0.0
    %312 = vmatpush1.msra.mxu0 0.0
    %313 = vmatprep.subr.mxu0 0.0
    %314 = vmatpush1.msra.mxu0 0.0
    %315 = vmatprep.subr.mxu0 0.0
    %316 = vmatpush1.msra.mxu0 0.0
    %317 = vmatprep.subr.mxu0 0.0
    %318 = vmatpush1.msra.mxu0 0.0
    %319 = vmatprep.subr.mxu0 0.0
    %320 = vmatpush1.msra.mxu0 0.0
    %321 = vmatprep.subr.mxu0 0.0
    %322 = vmatpush1.msra.mxu0 0.0
    %323 = vmatprep.mubr.f32.mxu0 0.0
    %324 = vmatmul.mubr.f32.gmra.mrb[0].mxu0 %v257
    %v325 = vpop.f32.mrb[0].mxu0
    %v326 = vadd.f32 0.0, %v325
    %v327 = vpop.f32.mrb[0].mxu0
    %328 = vdwg.mxu0
    %v329 = vtanh.pop %v326
    %v331 = vsel %vm47, %v255, 0
    %333 = vmatprep.subr.mxu0 0.0
    %334 = vmatpush1.msra.mxu0 %v43
    %335 = vmatprep.subr.mxu0 0.0
    %336 = vmatpush1.msra.mxu0 %v44
    %337 = vmatprep.subr.mxu0 0.0
    %338 = vmatpush1.msra.mxu0 %v45
    %339 = vmatprep.subr.mxu0 0.0
    %340 = vmatpush1.msra.mxu0 %v46
    %341 = vmatprep.subr.mxu0 0.0
    %342 = vmatpush1.msra.mxu0 0.0
    %343 = vmatprep.subr.mxu0 0.0
    %344 = vmatpush1.msra.mxu0 0.0
    %345 = vmatprep.subr.mxu0 0.0
    %346 = vmatpush1.msra.mxu0 0.0
    %347 = vmatprep.subr.mxu0 0.0
    %348 = vmatpush1.msra.mxu0 0.0
    %349 = vmatprep.subr.mxu0 0.0
    %350 = vmatpush1.msra.mxu0 0.0
    %351 = vmatprep.subr.mxu0 0.0
    %352 = vmatpush1.msra.mxu0 0.0
    %353 = vmatprep.subr.mxu0 0.0
    %354 = vmatpush1.msra.mxu0 0.0
    %355 = vmatprep.subr.mxu0 0.0
    %356 = vmatpush1.msra.mxu0 0.0
    %357 = vmatprep.subr.mxu0 0.0
    %358 = vmatpush1.msra.mxu0 0.0
    %359 = vmatprep.subr.mxu0 0.0
    %360 = vmatpush1.msra.mxu0 0.0
    %361 = vmatprep.subr.mxu0 0.0
    %362 = vmatpush1.msra.mxu0 0.0
    %363 = vmatprep.subr.mxu0 0.0
    %364 = vmatpush1.msra.mxu0 0.0
    %365 = vmatprep.subr.mxu0 0.0
    %366 = vmatpush1.msra.mxu0 0.0
    %367 = vmatprep.subr.mxu0 0.0
    %368 = vmatpush1.msra.mxu0 0.0
    %369 = vmatprep.subr.mxu0 0.0
    %370 = vmatpush1.msra.mxu0 0.0
    %371 = vmatprep.subr.mxu0 0.0
    %372 = vmatpush1.msra.mxu0 0.0
    %373 = vmatprep.subr.mxu0 0.0
    %374 = vmatpush1.msra.mxu0 0.0
    %375 = vmatprep.subr.mxu0 0.0
    %376 = vmatpush1.msra.mxu0 0.0
    %377 = vmatprep.subr.mxu0 0.0
    %378 = vmatpush1.msra.mxu0 0.0
    %379 = vmatprep.subr.mxu0 0.0
    %380 = vmatpush1.msra.mxu0 0.0
    %381 = vmatprep.subr.mxu0 0.0
    %382 = vmatpush1.msra.mxu0 0.0
    %383 = vmatprep.subr.mxu0 0.0
    %384 = vmatpush1.msra.mxu0 0.0
    %385 = vmatprep.subr.mxu0 0.0
    %386 = vmatpush1.msra.mxu0 0.0
    %387 = vmatprep.subr.mxu0 0.0
    %388 = vmatpush1.msra.mxu0 0.0
    %389 = vmatprep.subr.mxu0 0.0
    %390 = vmatpush1.msra.mxu0 0.0
    %391 = vmatprep.subr.mxu0 0.0
    %392 = vmatpush1.msra.mxu0 0.0
    %393 = vmatprep.subr.mxu0 0.0
    %394 = vmatpush1.msra.mxu0 0.0
    %395 = vmatprep.subr.mxu0 0.0
    %396 = vmatpush1.msra.mxu0 0.0
    %397 = vmatprep.mubr.f32.mxu0 0.0
    %398 = vmatmul.mubr.f32.gmra.mrb[0].mxu0 %v331
    %v399 = vpop.f32.mrb[0].mxu0
    %v400 = vadd.f32 0.0, %v399
    %v401 = vpop.f32.mrb[0].mxu0
    %402 = vdwg.mxu0
    %v403 = vtanh.pop %v400
    %v404 = vlaneseq
    %v405 = vshrl.u32 %v404, 7
    %v406 = vsub.s32 0, %v405
    %v407 = vrot.slane %v329, %v406
    %v408 = vlaneseq
    %v409 = vshrl.u32 %v408, 7
    %v410 = vsub.s32 0, %v409
    %v411 = vrot.slane %v403, %v410
    %v412 = vmul.f32 %v238, %v407
    %v413 = vmul.f32 %v239, %v411
    %v414 = vsel %vm47, %v412, 0.0
    %415 = vadd.xlane.f32.xlu0 %v414
    %v416 = vpop.xlane.xlu0 %415
    %v417 = vsel %vm47, %v413, 0.0
    %418 = vadd.xlane.f32.xlu0 %v417
    %v419 = vpop.xlane.xlu0 %418
    %v420 = vand.u32 2147483647, %v416
    %v421 = vand.u32 2147483647, %v419
    %v422 = vmax.f32 %v420, 1e-12
    %v423 = vmax.f32 %v421, 1e-12
    %v424 = vrcp.pop %v422
    %v425 = vmul.f32 %v416, %v424
    %v426 = vrcp.pop %v423
    %v427 = vmul.f32 %v419, %v426
    %v428 = vxor.u32 %v425, 2147483648
    %v429 = vxor.u32 %v427, 2147483648
    %v430 = vmul.f32 %v428, 1.442695
    %v431 = vpow.pop %v430
    %v432 = vmul.f32 %v429, 1.442695
    %v433 = vpow.pop %v432
    %v434 = vadd.f32 %v431, 1.0
    %v435 = vadd.f32 %v433, 1.0
    %v436 = vrcp.pop %v434
    %v437 = vmul.f32 1.0, %v436
    %v438 = vrcp.pop %v435
    %v439 = vmul.f32 1.0, %v438
    %v440 = vmul.f32 %v437, %v238
    %v441 = vmul.f32 %v439, %v239
    %v442 = vsel %vm47, %v440, 0.0
    %v443 = vrot.slane %v442, 4
    %v444 = vadd.f32 %v442, %v443
    %v445 = vrot.slane %v444, 2
    %v446 = vadd.f32 %v444, %v445
    %v447 = vrot.slane %v446, 1
    %v448 = vadd.f32 %v446, %v447
    %v449 = vsel %vm47, %v441, 0.0
    %v450 = vrot.slane %v449, 4
    %v451 = vadd.f32 %v449, %v450
    %v452 = vrot.slane %v451, 2
    %v453 = vadd.f32 %v451, %v452
    %v454 = vrot.slane %v453, 1
    %v455 = vadd.f32 %v453, %v454
    %457 = vrot.lane.b32.xlu0 %v455, 32
    %v458 = vpop.permute.xlu0 %457
    %v460 = vsel %vm47, %v448, %v458
    %vm461 = vcmask 516096
    %462 = vst.msk [vmem:[#allocation7] sm:$0x1] %vm461, %v460
    // Predicated region
    $region18: #{tpu_custom_call.1} parent=1 // pred_check
      _
    $region19: #{tpu_custom_call.1} parent=1 // pred_check_branch
      %464 = sbr.rel (0) target = $region21
    $region20: #{tpu_custom_call.1} parent=1 // pred_region
      %s466 = ssub.s32 16, 16
      %467 = vsyncadd [#allocation4], %s466
      %s469 = sshll.u32 [#allocation7], 4
      %s470 = int_to_ptr.vmem [resolvable:$true] %s469
      %472 = dma.vmem_to_hbm [thread:$0]  %s470, 16, %s2, [#allocation4]
    $region21: #{tpu_custom_call.1} parent=1 // pred_fallthru
      _
    // Predicated region
    $region22: #{tpu_custom_call.1} parent=1 // pred_check
      _
    $region23: #{tpu_custom_call.1} parent=1 // pred_check_branch
      %474 = sbr.rel (0) target = $region25
    $region24: #{tpu_custom_call.1} parent=1 // pred_region
      %475 = dma.done [#allocation4], 16
    $region25: #{tpu_custom_call.1} parent=1 // pred_fallthru
      _
    %476 = vsyncpa [#allocation3], 1
    %477 = vsyncpa [#allocation6], 1
    %478 = vsyncpa [#allocation4], 1

</llo_original>
